<compile_context>
chip_gen: v5e
topology: v5e:2x2
jax: 0.10.0
libtpu: 0.0.40
codegen_flags: <defaults>
</compile_context>

<pallas_src>
import functools

import jax
import jax.numpy as jnp
from jax.experimental import pallas as pl
from jax.experimental.pallas import tpu as pltpu


def _prompt_concat_kernel(prefix_ref, ctx_ref, suffix_ref, out_ref, *,
                          ctx_is_shared, n_ctx):
    """Assemble prompts for a tile of `tc` classes with three direct slice-stores.

    prefix_ref : (tc, 1, D)
    ctx_ref    : (n_ctx, D) if ctx_is_shared else (tc, n_ctx, D)
    suffix_ref : (tc, S_suf, D)
    out_ref    : (tc, S_tot, D)   with S_tot = 1 + n_ctx + S_suf
    """
    tc = out_ref.shape[0]
    d = out_ref.shape[-1]
    # Static slices of the output ref are zero-cost views; write each segment
    # straight into the output buffer (no concatenate temp, no extra VMEM copy).
    out_ref[:, 0:1, :] = prefix_ref[...]
    if ctx_is_shared:
        # Broadcast fused directly into the single slice-store.
        out_ref[:, 1:1 + n_ctx, :] = jnp.broadcast_to(
            ctx_ref[...][None], (tc, n_ctx, d))
    else:
        out_ref[:, 1:1 + n_ctx, :] = ctx_ref[...]
    out_ref[:, 1 + n_ctx:, :] = suffix_ref[...]


def _tpu_vmem_capacity_bytes():
    """Per-TensorCore VMEM capacity; conservative fallback if query fails."""
    try:
        return int(pltpu.get_tpu_info().vmem_capacity_bytes)
    except Exception:
        return 64 << 20  # assume the smallest (v7x) if we cannot query


def prompt_learner_forward(token_prefix, ctx, token_suffix, *, class_tile=None):
    """Pallas implementation of PromptLearner.forward (class_token_position='end').

    token_prefix : (n_cls, 1, D)
    ctx          : (n_ctx, D)  generic context, or (n_cls, n_ctx, D) class-specific
    token_suffix : (n_cls, S_suf, D)
    returns      : (n_cls, 1 + n_ctx + S_suf, D)
    """
    n_cls, _, d = token_prefix.shape
    s_suf = token_suffix.shape[1]
    dtype = token_prefix.dtype
    # Explicit cast: ctx is often an fp32 parameter while the CLIP buffers are
    # fp16/bf16 -- this is the ONE real cast, done in the wrapper.
    ctx = ctx.astype(dtype)

    ctx_is_shared = (ctx.ndim == 2)
    n_ctx = ctx.shape[0] if ctx_is_shared else ctx.shape[1]
    s_tot = 1 + n_ctx + s_suf
    itemsize = jnp.dtype(dtype).itemsize

    # ---- generation-aware sizing -------------------------------------------
    vmem_cap = _tpu_vmem_capacity_bytes()
    small_vmem = vmem_cap <= (64 << 20)        # v7x: 64 MiB / TC, 2 TCs / chip
    if small_vmem:
        budget = 20 << 20                      # per-step working-set budget
        vmem_ceiling = int(0.55 * vmem_cap)    # ~35 MiB cap on v7x
    else:
        budget = 56 << 20                      # v5e/v6e: 128 MiB VMEM
        vmem_ceiling = int(0.75 * vmem_cap)    # ~96 MiB cap

    # Per-class VMEM bytes per pipeline stage: prefix + suffix inputs + output
    # block (+ per-class ctx when class-specific).  Double-buffered below.
    per_class = (1 + s_suf + s_tot + (0 if ctx_is_shared else n_ctx)) * d * itemsize
    shared_ctx_bytes = (n_ctx * d * itemsize) if ctx_is_shared else 0
    # Largest tile whose double-buffered working set fits under the ceiling.
    max_safe_tc = max(
        1, (vmem_ceiling - 2 * shared_ctx_bytes - (4 << 20)) // (2 * per_class))

    if class_tile is None:
        tc = max(1, min(n_cls, budget // (2 * per_class), max_safe_tc))
        if small_vmem and n_cls >= 2:
            # Guarantee >=2 grid steps so the "parallel" class axis can be
            # sharded across both v7x TensorCores.
            tc = min(tc, pl.cdiv(n_cls, 2))
    else:
        # Keep an explicitly passed tile consistent with the VMEM limit.
        tc = max(1, min(int(class_tile), n_cls, max_safe_tc))
    tc = int(tc)

    grid = (pl.cdiv(n_cls, tc),)

    if ctx_is_shared:
        # Constant block index -> pipeline fetches ctx once, never re-DMAs it.
        ctx_spec = pl.BlockSpec((n_ctx, d), lambda i: (0, 0))
    else:
        ctx_spec = pl.BlockSpec((tc, n_ctx, d), lambda i: (i, 0, 0))

    # Double-buffered working set + slack, derived from the actual tile.
    working_set = 2 * tc * per_class + 2 * shared_ctx_bytes
    vmem_limit = int(min(max(working_set + (6 << 20), 16 << 20), vmem_ceiling))

    # Pure-bandwidth op: tell XLA so it can overlap surrounding work.
    ctx_bytes = (n_ctx * d if ctx_is_shared else n_cls * n_ctx * d) * itemsize
    bytes_accessed = (n_cls * (1 + s_suf) * d + n_cls * s_tot * d) * itemsize + ctx_bytes
    cost = pl.CostEstimate(flops=0, transcendentals=0,
                           bytes_accessed=int(bytes_accessed))

    kernel = functools.partial(_prompt_concat_kernel,
                               ctx_is_shared=ctx_is_shared, n_ctx=n_ctx)

    return pl.pallas_call(
        kernel,
        out_shape=jax.ShapeDtypeStruct((n_cls, s_tot, d), dtype),
        grid_spec=pltpu.PrefetchScalarGridSpec(
            num_scalar_prefetch=0,
            grid=grid,
            in_specs=[
                pl.BlockSpec((tc, 1, d), lambda i: (i, 0, 0)),
                ctx_spec,
                pl.BlockSpec((tc, s_suf, d), lambda i: (i, 0, 0)),
            ],
            out_specs=pl.BlockSpec((tc, s_tot, d), lambda i: (i, 0, 0)),
        ),
        compiler_params=pltpu.CompilerParams(
            dimension_semantics=("parallel",),
            vmem_limit_bytes=vmem_limit,
        ),
        cost_estimate=cost,
    )(token_prefix, ctx, token_suffix)


def _reference_forward(token_prefix, ctx, token_suffix):
    n_cls = token_prefix.shape[0]
    if ctx.ndim == 2:
        ctx = jnp.broadcast_to(ctx[None], (n_cls,) + ctx.shape)
    ctx = ctx.astype(token_prefix.dtype)
    return jnp.concatenate([token_prefix, ctx, token_suffix], axis=1)


if __name__ == "__main__":
    # Synthetic, deterministic "CLIP-like" setup at small shapes.
    n_cls = 4
    n_ctx = 4
    d = 128                        # ctx_dim (lane-aligned)
    seq_len = 16                   # CLIP uses 77; small here
    s_suf = seq_len - 1 - n_ctx    # suffix = name + EOS + padding embeddings

    key = jax.random.PRNGKey(0)
    k1, k2, k3, k4 = jax.random.split(key, 4)

    # Stand-ins for clip_model.token_embedding(tokenized_prompts) buffers.
    token_prefix = jax.random.normal(k1, (n_cls, 1, d), dtype=jnp.float32)
    token_suffix = jax.random.normal(k2, (n_cls, s_suf, d), dtype=jnp.float32)
    # nn.init.normal_(ctx_vectors, std=0.02) -- unified (generic) context.
    ctx_unified = 0.02 * jax.random.normal(k3, (n_ctx, d), dtype=jnp.float32)
    # Class-specific contexts (CSC branch).
    ctx_csc = 0.02 * jax.random.normal(k4, (n_cls, n_ctx, d), dtype=jnp.float32)

    expected = _reference_forward(token_prefix, ctx_unified, token_suffix)

    # 1) default (auto) class tile.
    prompts = jax.block_until_ready(
        prompt_learner_forward(token_prefix, ctx_unified, token_suffix))
    assert prompts.shape == (n_cls, seq_len, d), prompts.shape
    assert jnp.allclose(prompts, expected), "mismatch vs reference (default tile)"

    # 2) explicit class tile that divides n_cls (multi-step pipeline).
    prompts2 = jax.block_until_ready(
        prompt_learner_forward(token_prefix, ctx_unified, token_suffix, class_tile=2))
    assert jnp.allclose(prompts2, expected), "mismatch vs reference (class_tile=2)"

    # 3) class tile that does NOT divide n_cls (partial last block).
    prompts3 = jax.block_until_ready(
        prompt_learner_forward(token_prefix, ctx_unified, token_suffix, class_tile=3))
    assert jnp.allclose(prompts3, expected), "mismatch vs reference (class_tile=3)"

    # 4) class-specific contexts (CSC) branch.
    prompts_csc = jax.block_until_ready(
        prompt_learner_forward(token_prefix, ctx_csc, token_suffix))
    expected_csc = _reference_forward(token_prefix, ctx_csc, token_suffix)
    assert jnp.allclose(prompts_csc, expected_csc), "mismatch vs reference (CSC)"

    print("KERNEL_OK")
</pallas_src>

<mosaic_0001>
module attributes {stable_mosaic.version = 11 : i64} {
  func.func @_prompt_concat_kernel(%arg0: i32, %arg1: memref<2x1x128xf32, #tpu.memory_space<vmem>>, %arg2: memref<4x128xf32, #tpu.memory_space<vmem>>, %arg3: memref<2x11x128xf32, #tpu.memory_space<vmem>>, %arg4: memref<2x16x128xf32, #tpu.memory_space<vmem>>) attributes {dimension_semantics = [#tpu.dimension_semantics<parallel>], iteration_bounds = array<i64: 2>, scalar_prefetch = 0 : i64, scratch_operands = 0 : i64, tpu.core_type = #tpu.core_type<tc>, window_params = [{transform_indices = @transform_0, window_bounds = array<i64: 2, 1, 128>}, {pipeline_mode = #tpu.pipeline_mode<synchronous>, transform_indices = @transform_1, window_bounds = array<i64: 4, 128>}, {transform_indices = @transform_2, window_bounds = array<i64: 2, 11, 128>}, {transform_indices = @transform_3, window_bounds = array<i64: 2, 16, 128>}]} {
    %c0 = arith.constant 0 : index
    %c0_0 = arith.constant 0 : index
    %c0_1 = arith.constant 0 : index
    %0 = vector.load %arg1[%c0, %c0_0, %c0_1] : memref<2x1x128xf32, #tpu.memory_space<vmem>>, vector<2x1x128xf32>
    %c0_2 = arith.constant 0 : index
    %c0_3 = arith.constant 0 : index
    %c0_4 = arith.constant 0 : index
    %1 = vector.load %arg4[%c0_2, %c0_3, %c0_4] : memref<2x16x128xf32, #tpu.memory_space<vmem>>, vector<2x1x128xf32>
    tpu.vector_store %arg4[%c0_2, %c0_3, %c0_4], %0 {strides = array<i32>} : memref<2x16x128xf32, #tpu.memory_space<vmem>>, vector<2x1x128xf32>,
    %c0_5 = arith.constant 0 : index
    %c0_6 = arith.constant 0 : index
    %2 = vector.load %arg2[%c0_5, %c0_6] : memref<4x128xf32, #tpu.memory_space<vmem>>, vector<4x128xf32>
    %3 = vector.shape_cast %2 : vector<4x128xf32> to vector<1x4x128xf32>
    %4 = vector.shape_cast %3 : vector<1x4x128xf32> to vector<1x4x128xf32>
    %5 = vector.broadcast %4 : vector<1x4x128xf32> to vector<2x4x128xf32>
    %c0_7 = arith.constant 0 : index
    %c1 = arith.constant 1 : index
    %c0_8 = arith.constant 0 : index
    %6 = vector.load %arg4[%c0_7, %c1, %c0_8] : memref<2x16x128xf32, #tpu.memory_space<vmem>>, vector<2x4x128xf32>
    tpu.vector_store %arg4[%c0_7, %c1, %c0_8], %5 {strides = array<i32>} : memref<2x16x128xf32, #tpu.memory_space<vmem>>, vector<2x4x128xf32>,
    %c0_9 = arith.constant 0 : index
    %c0_10 = arith.constant 0 : index
    %c0_11 = arith.constant 0 : index
    %7 = vector.load %arg3[%c0_9, %c0_10, %c0_11] : memref<2x11x128xf32, #tpu.memory_space<vmem>>, vector<2x11x128xf32>
    %c0_12 = arith.constant 0 : index
    %c5 = arith.constant 5 : index
    %c0_13 = arith.constant 0 : index
    %8 = vector.load %arg4[%c0_12, %c5, %c0_13] : memref<2x16x128xf32, #tpu.memory_space<vmem>>, vector<2x11x128xf32>
    tpu.vector_store %arg4[%c0_12, %c5, %c0_13], %7 {strides = array<i32>} : memref<2x16x128xf32, #tpu.memory_space<vmem>>, vector<2x11x128xf32>,
    return
  }
  func.func @transform_0(%arg0: i32) -> (i32, i32, i32) {
    %c0_i32 = arith.constant 0 : i32
    %c0_i32_0 = arith.constant 0 : i32
    %c0_i32_1 = arith.constant 0 : i32
    return %arg0, %c0_i32, %c0_i32_0 : i32, i32, i32
  }
  func.func @transform_1(%arg0: i32) -> (i32, i32) {
    %c0_i32 = arith.constant 0 : i32
    %c0_i32_0 = arith.constant 0 : i32
    %c0_i32_1 = arith.constant 0 : i32
    return %c0_i32, %c0_i32_0 : i32, i32
  }
  func.func @transform_2(%arg0: i32) -> (i32, i32, i32) {
    %c0_i32 = arith.constant 0 : i32
    %c0_i32_0 = arith.constant 0 : i32
    %c0_i32_1 = arith.constant 0 : i32
    return %arg0, %c0_i32, %c0_i32_0 : i32, i32, i32
  }
  func.func @transform_3(%arg0: i32) -> (i32, i32, i32) {
    %c0_i32 = arith.constant 0 : i32
    %c0_i32_0 = arith.constant 0 : i32
    %c0_i32_1 = arith.constant 0 : i32
    return %arg0, %c0_i32, %c0_i32_0 : i32, i32, i32
  }
}

</mosaic_0001>

<llo_original>
// kernel: tpu_custom_call.1
$region0: #{tpu_custom_call.1}
  #allocation0 [shape = 'u32[]', space=smem, size = 0x4, offset = 0x4, fixed_abs, tag = 'smem constant byte address 0x4 - core index']
  #allocation1 [shape = 'u32[72,128]{1,0:T(1,128)}', space=vmem, size = 0x9000, scoped, tag = 'internal scratch']
  %s0 = inlined_call_operand.vmem [shape: f32[4,1,128], index: 0, kind: input, shape index: {}]
  %s1 = inlined_call_operand.vmem [shape: f32[4,128], index: 1, kind: input, shape index: {}]
  %s2 = inlined_call_operand.vmem [shape: f32[4,11,128], index: 2, kind: input, shape index: {}]
  %s3 = inlined_call_operand.hbm [shape: f32[4,16,128], index: 3, kind: output, shape index: {}]
  %s4 = sld [smem:[#allocation0]]
  $region45: #{tpu_custom_call.1} parent=0
    _
  %s6 = ssub.s32 1, %s4
  %s7 = scalar_select 0, %s6, %s4
  $region1: #{tpu_custom_call.1} parent=0
    #allocation2 [shape = 'u8[32768]{0}', space=vmem, size = 0x8000, scoped, tag = 'output window, operand 0']
    #allocation3 [shape = 's32[2]{0}', space=sflag, size = 0x8, scoped, tag = 'scoped memory for tpu_custom_call.1']
    %8 = vsyncpa [#allocation3], 0
    %s9 = scalar_lea.sflag [#allocation3], 1
    %10 = vsyncpa %s9, 0
    loop: start=0, step=1, limit=4
    $region2: #{tpu_custom_call.1} parent=1 // loop_pre_header
      _
    $region3: #{tpu_custom_call.1} parent=1 // loop_header
      %s12 = sphi 0, %s16
      %p13 = scmp.ge.s32.totalorder %s12, 4
      %s22 = sphi 0, %s24
      %s25 = sphi 0, %s22
      %s26 = sphi 0, %s25
      %s42 = sphi 0, %s26
      %s46 = sphi 0, %s46
      %s48 = sphi 0, %s46
      %s49 = sphi 0, %s48
      %s63 = sphi 0, %s49
      %s69 = sphi 0, %s71
      %s72 = sphi 0, %s69
      %s73 = sphi 0, %s72
      %s89 = sphi 0, %s73
      %s95 = sphi 0, %s97
      %s98 = sphi 0, %s95
      %s99 = sphi 0, %s98
      %s115 = sphi 0, %s99
    $region4: #{tpu_custom_call.1} parent=1 // loop_header_branch
      %15 = sbr.rel (%p13) target = $region8
    $region5: #{tpu_custom_call.1} parent=1 // loop_body
      %s17 = ssub.s32 %s12, 1
      %s18 = ssub.s32 %s12, 2
      %s19 = sadd.s32 %s12, 1
      %s20 = ssub.s32 %s12, %s19
      %p21 = scmp.eq.s32.totalorder %s20, 0
      %s23 = sadd.s32 %s22, 1
      %s24 = scalar_select %p21, %s22, %s23
      %p27 = pneg %p21
      %p28 = scmp.eq.s32.totalorder %s12, 1
      %p29 = por %p27, %p28
      %p30 = scmp.ne.s32.totalorder %s22, %s25
      %p31 = scmp.eq.s32.totalorder %s12, 0
      %p32 = por %p30, %p31
      %p33 = scmp.ne.s32.totalorder %s22, %s25
      %p34 = scmp.eq.s32.totalorder %s17, 1
      %p35 = por %p33, %p34
      %p36 = scmp.ne.s32.totalorder %s25, %s26
      %p37 = scmp.eq.s32.totalorder %s17, 0
      %p38 = por %p36, %p37
      %p39 = scmp.ne.s32.totalorder %s25, %s26
      %p40 = scmp.eq.s32.totalorder %s18, 1
      %p41 = por %p39, %p40
      %p43 = scmp.ne.s32.totalorder %s26, %s42
      %p44 = scmp.eq.s32.totalorder %s18, 0
      %p45 = por %p43, %p44
      %s47 = sadd.s32 %s46, 1
      %p50 = scmp.eq.s32.totalorder %s12, 1
      %p51 = scmp.ne.s32.totalorder %s46, %s48
      %p52 = scmp.eq.s32.totalorder %s12, 0
      %p53 = por %p51, %p52
      %p54 = scmp.ne.s32.totalorder %s46, %s48
      %p55 = scmp.eq.s32.totalorder %s17, 1
      %p56 = por %p54, %p55
      %p57 = scmp.ne.s32.totalorder %s48, %s49
      %p58 = scmp.eq.s32.totalorder %s17, 0
      %p59 = por %p57, %p58
      %p60 = scmp.ne.s32.totalorder %s48, %s49
      %p61 = scmp.eq.s32.totalorder %s18, 1
      %p62 = por %p60, %p61
      %p64 = scmp.ne.s32.totalorder %s49, %s63
      %p65 = scmp.eq.s32.totalorder %s18, 0
      %p66 = por %p64, %p65
      %s67 = ssub.s32 %s12, %s19
      %p68 = scmp.eq.s32.totalorder %s67, 0
      %s70 = sadd.s32 %s69, 1
      %s71 = scalar_select %p68, %s69, %s70
      %p74 = pneg %p68
      %p75 = scmp.eq.s32.totalorder %s12, 1
      %p76 = por %p74, %p75
      %p77 = scmp.ne.s32.totalorder %s69, %s72
      %p78 = scmp.eq.s32.totalorder %s12, 0
      %p79 = por %p77, %p78
      %p80 = scmp.ne.s32.totalorder %s69, %s72
      %p81 = scmp.eq.s32.totalorder %s17, 1
      %p82 = por %p80, %p81
      %p83 = scmp.ne.s32.totalorder %s72, %s73
      %p84 = scmp.eq.s32.totalorder %s17, 0
      %p85 = por %p83, %p84
      %p86 = scmp.ne.s32.totalorder %s72, %s73
      %p87 = scmp.eq.s32.totalorder %s18, 1
      %p88 = por %p86, %p87
      %p90 = scmp.ne.s32.totalorder %s73, %s89
      %p91 = scmp.eq.s32.totalorder %s18, 0
      %p92 = por %p90, %p91
      %s93 = ssub.s32 %s12, %s19
      %p94 = scmp.eq.s32.totalorder %s93, 0
      %s96 = sadd.s32 %s95, 1
      %s97 = scalar_select %p94, %s95, %s96
      %p100 = pneg %p94
      %p101 = scmp.eq.s32.totalorder %s12, 1
      %p102 = por %p100, %p101
      %p103 = scmp.ne.s32.totalorder %s95, %s98
      %p104 = scmp.eq.s32.totalorder %s12, 0
      %p105 = por %p103, %p104
      %p106 = scmp.ne.s32.totalorder %s95, %s98
      %p107 = scmp.eq.s32.totalorder %s17, 1
      %p108 = por %p106, %p107
      %p109 = scmp.ne.s32.totalorder %s98, %s99
      %p110 = scmp.eq.s32.totalorder %s17, 0
      %p111 = por %p109, %p110
      %p112 = scmp.ne.s32.totalorder %s98, %s99
      %p113 = scmp.eq.s32.totalorder %s18, 1
      %p114 = por %p112, %p113
      %p116 = scmp.ne.s32.totalorder %s99, %s115
      %p117 = scmp.eq.s32.totalorder %s18, 0
      %p118 = por %p116, %p117
      %p119 = scmp.le.s32.totalorder 1, %s12
      %p120 = scmp.lt.s32.totalorder %s12, 3
      %p121 = pnand %p119, %p120
      %p122 = pneg %p121
      // Predicated region
      $region9: #{tpu_custom_call.1} parent=5 // pred_check
        _
      $region10: #{tpu_custom_call.1} parent=5 // pred_check_branch
        %124 = sbr.rel (%p121) target = $region12
      $region11: #{tpu_custom_call.1} parent=5 // pred_region
        %s125 = ssub.s32 %s12, 1
        // Predicated region
        $region13: #{tpu_custom_call.1} parent=11 // pred_check
          %p126 = pneg %p59
        $region14: #{tpu_custom_call.1} parent=11 // pred_check_branch
          %128 = sbr.rel (%p126) target = $region16
        $region15: #{tpu_custom_call.1} parent=11 // pred_region
          _
        $region16: #{tpu_custom_call.1} parent=11 // pred_fallthru
          _
      $region12: #{tpu_custom_call.1} parent=5 // pred_fallthru
        _
      %p129 = scmp.lt.s32.totalorder %s12, 2
      // Predicated region
      $region17: #{tpu_custom_call.1} parent=5 // pred_check
        %p130 = pneg %p129
      $region18: #{tpu_custom_call.1} parent=5 // pred_check_branch
        %132 = sbr.rel (%p130) target = $region20
      $region19: #{tpu_custom_call.1} parent=5 // pred_region
        // Predicated region
        $region21: #{tpu_custom_call.1} parent=19 // pred_check
          %p133 = pneg %p32
        $region22: #{tpu_custom_call.1} parent=19 // pred_check_branch
          %135 = sbr.rel (%p133) target = $region24
        $region23: #{tpu_custom_call.1} parent=19 // pred_region
          %s136 = smul.u32 2, %s12
          %p137 = scmp.lt.s32.totalorder %s136, 3
          %s138 = scalar_select %p137, %s136, 3
          %s139 = scalar_lea.vmem %s0, %s138
          %s140 = smul.u32 2, %s12
        $region24: #{tpu_custom_call.1} parent=19 // pred_fallthru
          _
        // Predicated region
        $region25: #{tpu_custom_call.1} parent=19 // pred_check
          %p141 = pneg %p79
        $region26: #{tpu_custom_call.1} parent=19 // pred_check_branch
          %143 = sbr.rel (%p141) target = $region28
        $region27: #{tpu_custom_call.1} parent=19 // pred_region
          %s144 = smul.u32 2, %s12
          %p145 = scmp.lt.s32.totalorder %s144, 3
          %s146 = scalar_select %p145, %s144, 3
          %s147 = smul.addr %s146, 2
          %s148 = smul.addr %s147, 8
          %s149 = scalar_lea.vmem %s2, %s148
          %s150 = smul.u32 2, %s12
        $region28: #{tpu_custom_call.1} parent=19 // pred_fallthru
          _
      $region20: #{tpu_custom_call.1} parent=5 // pred_fallthru
        _
      %p151 = scmp.le.s32.totalorder 1, %s12
      %p152 = scmp.lt.s32.totalorder %s12, 3
      %p153 = pnand %p151, %p152
      %p154 = pneg %p153
      // Predicated region
      $region29: #{tpu_custom_call.1} parent=5 // pred_check
        _
      $region30: #{tpu_custom_call.1} parent=5 // pred_check_branch
        %156 = sbr.rel (%p153) target = $region32
      $region31: #{tpu_custom_call.1} parent=5 // pred_region
        %s157 = ssub.s32 %s12, 1
        %s158 = smul.u32 2, %s17
        %p159 = scmp.lt.s32.totalorder %s158, 3
        %s160 = scalar_select %p159, %s158, 3
        %s161 = scalar_lea.vmem %s0, %s160
        %p162 = pneg %p38
        %p163 = pneg %p35
        %p164 = pneg %p59
        %p165 = pneg %p56
        %s166 = smul.u32 2, %s17
        %p167 = scmp.lt.s32.totalorder %s166, 3
        %s168 = scalar_select %p167, %s166, 3
        %s169 = smul.addr %s168, 2
        %s170 = smul.addr %s169, 8
        %s171 = scalar_lea.vmem %s2, %s170
        %p172 = pneg %p85
        %p173 = pneg %p82
        %p174 = pneg %p111
        %p175 = pneg %p108
        %s176 = sand.u32 %s98, 1
        %s177 = scalar_lea.sflag [#allocation3], %s176
        %s178 = sand.u32 %s98, 1
        %s179 = smul.addr %s178, 32
        %s180 = scalar_lea.vmem [#allocation2], %s179
        %s181 = smul.u32 2, %s17
        %p182 = scmp.lt.s32.totalorder %s181, 3
        %s183 = scalar_select %p182, %s181, 3
        %s184 = scalar_lea.vmem %s0, %s183
        %s185 = smul.u32 2, %s17
        %s186 = smul.u32 2, %s17
        %p187 = scmp.lt.s32.totalorder %s186, 3
        %s188 = scalar_select %p187, %s186, 3
        %s189 = smul.addr %s188, 2
        %s190 = smul.addr %s189, 8
        %s191 = scalar_lea.vmem %s2, %s190
        %s192 = smul.u32 2, %s17
        %s193 = smul.u32 2, %s17
        %v194 = vld [vmem:[%s184] sm:$0x1]
        %v195 = vld [vmem:[%s184 + $0x1] sm:$0x1]
        %196 = vst [vmem:[%s180] sm:$0x1] %v194
        %197 = vst [vmem:[%s180 + $0x10] sm:$0x1] %v195
        %v198 = vld [vmem:[%s1] sm:$0xf]
        %199 = vst [vmem:[%s180 + $0x1] sm:$0xf] %v198
        %200 = vst [vmem:[%s180 + $0x11] sm:$0xf] %v198
        %v201 = vld [vmem:[%s191] sm:$0xff]
        %v202 = vld [vmem:[%s191 + $0x8] sm:$0x7]
        %v203 = vld [vmem:[%s191 + $0x10] sm:$0xff]
        %v204 = vld [vmem:[%s191 + $0x18] sm:$0x7]
        %205 = vst [vmem:[%s180 + $0x5] sm:$0xff] %v201
        %206 = vst [vmem:[%s180 + $0xd] sm:$0x7] %v202
        %207 = vst [vmem:[%s180 + $0x15] sm:$0xff] %v203
        %208 = vst [vmem:[%s180 + $0x1d] sm:$0x7] %v204
        %s209 = sand.u32 %s98, 1
        %s210 = scalar_lea.sflag [#allocation3], %s209
        %s211 = sand.u32 %s98, 1
        %s212 = smul.addr %s211, 32
        %s213 = scalar_lea.vmem [#allocation2], %s212
        // Predicated region
        $region33: #{tpu_custom_call.1} parent=31 // pred_check
          %p214 = pneg %p108
        $region34: #{tpu_custom_call.1} parent=31 // pred_check_branch
          %216 = sbr.rel (%p214) target = $region36
        $region35: #{tpu_custom_call.1} parent=31 // pred_region
          %s217 = smul.u32 2, %s17
          %219 = vsyncadd %s210, 0
          %s220 = smul.addr %s217, 2
          %s221 = smul.addr %s220, 8
          %s222 = scalar_lea.hbm %s3, %s221
          %s223 = sshll.u32 %s213, 4
          %s224 = int_to_ptr.vmem [resolvable:$true] %s223
          %s225 = sshll.u32 %s222, 4
          %s226 = int_to_ptr.hbm [resolvable:$true] %s225
          %231 = dma.vmem_to_hbm [thread:$0]  %s224, 512, %s226, %s210, 128, 128, 8
        $region36: #{tpu_custom_call.1} parent=31 // pred_fallthru
          _
      $region32: #{tpu_custom_call.1} parent=5 // pred_fallthru
        _
      %p232 = scmp.le.s32.totalorder 2, %s12
      // Predicated region
      $region37: #{tpu_custom_call.1} parent=5 // pred_check
        %p233 = pneg %p232
      $region38: #{tpu_custom_call.1} parent=5 // pred_check_branch
        %235 = sbr.rel (%p233) target = $region40
      $region39: #{tpu_custom_call.1} parent=5 // pred_region
        %s236 = ssub.s32 %s12, 2
        // Predicated region
        $region41: #{tpu_custom_call.1} parent=39 // pred_check
          %p237 = pneg %p114
        $region42: #{tpu_custom_call.1} parent=39 // pred_check_branch
          %239 = sbr.rel (%p237) target = $region44
        $region43: #{tpu_custom_call.1} parent=39 // pred_region
          %s240 = sand.u32 %s99, 1
          %s241 = scalar_lea.sflag [#allocation3], %s240
          %s242 = sand.u32 %s99, 1
          %s243 = smul.addr %s242, 32
          %s244 = scalar_lea.vmem [#allocation2], %s243
          %246 = dma.done %s241, 512
        $region44: #{tpu_custom_call.1} parent=39 // pred_fallthru
          _
      $region40: #{tpu_custom_call.1} parent=5 // pred_fallthru
        _
    $region6: #{tpu_custom_call.1} parent=1 // loop_footer
      %s16 = sadd.s32 1, %s12
    $region7: #{tpu_custom_call.1} parent=1 // loop_footer_branch
      %11 = sbr.rel target = $region3
    $region8: #{tpu_custom_call.1} parent=1 // loop_exit
      _
    %247 = vsyncpa [#allocation3], 1
    %s248 = scalar_lea.sflag [#allocation3], 1
    %249 = vsyncpa %s248, 1

</llo_original>
